<compile_context>
chip_gen: v6e
topology: v6e:2x2x1
jax: 0.10.0
libtpu: 0.0.40
codegen_flags: <defaults>
</compile_context>

<pallas_src>
import jax
import jax.numpy as jnp
from jax.experimental import pallas as pl
from jax.experimental.pallas import tpu as pltpu

SUBLANE = 8  # f32 sublane group


def _round_up(n, m):
    return ((n + m - 1) // m) * m


def generator_kernel(x_ref, w1_ref, b1_ref, w2_ref, b2_ref, out_ref):
    # --- gconv1: Linear + ReLU (MXU matmul, f32 accumulate) ---
    h1 = jnp.dot(x_ref[...], w1_ref[...], preferred_element_type=jnp.float32)
    h1 = jnp.maximum(h1 + b1_ref[...], 0.0)          # (1, H0) bias broadcasts over rows
    # --- gconv2: Linear + Sigmoid ---
    h2 = jnp.dot(h1, w2_ref[...], preferred_element_type=jnp.float32)
    out_ref[...] = jax.nn.sigmoid(h2 + b2_ref[...]).astype(out_ref.dtype)


def init_generator_params(key, input_size, hidden_size):
    """Deterministic init mirroring nn.Linear: weight (out, in), bias (out,)."""
    k1, k2, k3, k4 = jax.random.split(key, 4)
    h0, h1 = hidden_size
    bound1 = 1.0 / jnp.sqrt(input_size)
    bound2 = 1.0 / jnp.sqrt(h0)
    w1 = jax.random.uniform(k1, (h0, input_size), jnp.float32, -bound1, bound1)
    b1 = jax.random.uniform(k2, (h0,), jnp.float32, -bound1, bound1)
    w2 = jax.random.uniform(k3, (h1, h0), jnp.float32, -bound2, bound2)
    b2 = jax.random.uniform(k4, (h1,), jnp.float32, -bound2, bound2)
    return w1, b1, w2, b2


def prepare_generator_params(w1, b1, w2, b2):
    """One-time prep: transpose weights to (in, out), reshape biases to (1, out).

    No padding: every kernel block's last dim equals the full array dim and the
    second-to-last dims are multiples of 8, so logical shapes are legal and we
    avoid any extra HBM traffic for padded lanes.
    """
    w1_t = jnp.asarray(w1.T, jnp.float32)            # (in, H0)
    b1_r = jnp.asarray(b1, jnp.float32).reshape(1, -1)
    w2_t = jnp.asarray(w2.T, jnp.float32)            # (H0, H1)
    b2_r = jnp.asarray(b2, jnp.float32).reshape(1, -1)
    return w1_t, b1_r, w2_t, b2_r


def _choose_batch_tile(batch):
    """Explicit crossover policy (perf review):

    - Moderate batches: no-grid, whole problem resident in VMEM. A short grid
      on a single-TC chip (v5e/v6e) is just a serial loop with pipeline
      prologue/epilogue overhead and no benefit.
    - Very large fused batches: gridded path with 2048-row tiles. That keeps
      double-buffered x/out blocks plus the (tile, H0) h1 temporary around
      ~2 MiB -- far under v5e's 16 MiB scoped VMEM and v7x's 32 MiB scoped
      limit -- while DMAs are large enough to approach the HBM roofline, and
      it yields >= 2 grid steps so the "parallel" axis load-balances across
      v7x's 2 TensorCores.
    """
    if batch <= 2048:
        return None
    return 2048


def generator_forward(x, w1_t, b1_r, w2_t, b2_r, *, batch_tile="auto"):
    """x: (B, input_size), f32. Params from prepare_generator_params().

    batch_tile:
      "auto" -> policy in _choose_batch_tile.
      None   -> single no-grid call (whole problem resident in VMEM).
      int    -> one call, grid over batch rows marked "parallel".
    """
    B, in_size = x.shape
    h0 = w1_t.shape[1]
    n_out = w2_t.shape[1]
    x = x.astype(jnp.float32)

    if batch_tile == "auto":
        batch_tile = _choose_batch_tile(B)

    if batch_tile is None:
        bp = _round_up(max(B, SUBLANE), SUBLANE)
    else:
        batch_tile = _round_up(batch_tile, SUBLANE)
        bp = _round_up(max(B, batch_tile), batch_tile)

    # Pad rows only if B is not already aligned (common aligned case: no-op,
    # no extra HBM pass over x).
    if bp != B:
        xp = jnp.zeros((bp, in_size), jnp.float32).at[:B, :].set(x)
    else:
        xp = x

    # Cost estimate from LOGICAL dims; sigmoid ~ exp + reciprocal = 2 transc/elem.
    cost = pl.CostEstimate(
        flops=2 * B * (in_size * h0 + h0 * n_out),
        transcendentals=2 * B * n_out,
        bytes_accessed=4 * (B * in_size + in_size * h0 + h0
                            + h0 * n_out + n_out + B * n_out),
    )
    out_shape = jax.ShapeDtypeStruct((bp, n_out), jnp.float32)

    if batch_tile is None:
        out_p = pl.pallas_call(
            generator_kernel,
            out_shape=out_shape,
            in_specs=[pl.BlockSpec(memory_space=pltpu.MemorySpace.VMEM)] * 5,
            out_specs=pl.BlockSpec(memory_space=pltpu.MemorySpace.VMEM),
            cost_estimate=cost,
        )(xp, w1_t, b1_r, w2_t, b2_r)
    else:
        grid = (bp // batch_tile,)
        out_p = pl.pallas_call(
            generator_kernel,
            out_shape=out_shape,
            grid=grid,
            in_specs=[
                pl.BlockSpec((batch_tile, in_size), lambda i: (i, 0)),
                pl.BlockSpec((in_size, h0), lambda i: (0, 0)),
                pl.BlockSpec((1, h0), lambda i: (0, 0)),
                pl.BlockSpec((h0, n_out), lambda i: (0, 0)),
                pl.BlockSpec((1, n_out), lambda i: (0, 0)),
            ],
            out_specs=pl.BlockSpec((batch_tile, n_out), lambda i: (i, 0)),
            compiler_params=pltpu.CompilerParams(
                dimension_semantics=("parallel",),   # shards batch across TCs on v7x
            ),
            cost_estimate=cost,
        )(xp, w1_t, b1_r, w2_t, b2_r)

    # Row trim only when padding rows were added; output lanes are already logical.
    return out_p if bp == B else out_p[:B, :]


def _reference(x, w1, b1, w2, b2):
    h1 = jnp.maximum(x @ w1.T + b1, 0.0)
    return jax.nn.sigmoid(h1 @ w2.T + b2)


if __name__ == "__main__":
    key = jax.random.PRNGKey(0)
    input_size = 32          # Adjacency_Modified feature dim
    hidden_size = [64, 32]   # hidden_size[0], hidden_size[1]

    kx, kparams, kx2 = jax.random.split(key, 3)
    w1, b1, w2, b2 = init_generator_params(kparams, input_size, hidden_size)
    w1_t, b1_r, w2_t, b2_r = prepare_generator_params(w1, b1, w2, b2)

    # --- small path (batch=8): auto policy -> no-grid, whole problem in VMEM ---
    batch = 8
    x = jax.random.normal(kx, (batch, input_size), jnp.float32)
    out = jax.block_until_ready(generator_forward(x, w1_t, b1_r, w2_t, b2_r))
    ref = _reference(x, w1, b1, w2, b2)
    assert out.shape == (batch, hidden_size[1])
    assert jnp.allclose(out, ref, atol=1e-5, rtol=1e-5)

    # --- fused/batched path: explicit tile, 2 even grid steps (both TCs on v7x) ---
    big_batch = 512
    xb = jax.random.normal(kx2, (big_batch, input_size), jnp.float32)
    out_b = jax.block_until_ready(
        generator_forward(xb, w1_t, b1_r, w2_t, b2_r, batch_tile=256)
    )
    ref_b = _reference(xb, w1, b1, w2, b2)
    assert out_b.shape == (big_batch, hidden_size[1])
    assert jnp.allclose(out_b, ref_b, atol=1e-5, rtol=1e-5)

    print("KERNEL_OK")
</pallas_src>

<mosaic_0001>
module attributes {stable_mosaic.version = 11 : i64} {
  func.func @generator_kernel(%arg0: memref<8x32xf32, #tpu.memory_space<vmem>>, %arg1: memref<32x64xf32, #tpu.memory_space<vmem>>, %arg2: memref<1x64xf32, #tpu.memory_space<vmem>>, %arg3: memref<64x32xf32, #tpu.memory_space<vmem>>, %arg4: memref<1x32xf32, #tpu.memory_space<vmem>>, %arg5: memref<8x32xf32, #tpu.memory_space<vmem>>) attributes {dimension_semantics = [], scalar_prefetch = 0 : i64, scratch_operands = 0 : i64, tpu.core_type = #tpu.core_type<tc>} {
    %c0 = arith.constant 0 : index
    %c0_0 = arith.constant 0 : index
    %0 = vector.load %arg0[%c0, %c0_0] : memref<8x32xf32, #tpu.memory_space<vmem>>, vector<8x32xf32>
    %c0_1 = arith.constant 0 : index
    %c0_2 = arith.constant 0 : index
    %1 = vector.load %arg1[%c0_1, %c0_2] : memref<32x64xf32, #tpu.memory_space<vmem>>, vector<32x64xf32>
    %cst = arith.constant dense<0.000000e+00> : vector<8x64xf32>
    %2 = tpu.matmul %0, %1, %cst {dimension_numbers = #tpu.dot_dimension_numbers<[1], [0], [0], [1], [0, 0, 1, 1], [], []>} : vector<8x32xf32>, vector<32x64xf32>, vector<8x64xf32> -> vector<8x64xf32>
    %c0_3 = arith.constant 0 : index
    %c0_4 = arith.constant 0 : index
    %3 = vector.load %arg2[%c0_3, %c0_4] : memref<1x64xf32, #tpu.memory_space<vmem>>, vector<1x64xf32>
    %4 = vector.broadcast %3 : vector<1x64xf32> to vector<8x64xf32>
    %5 = arith.addf %2, %4 : vector<8x64xf32>
    %cst_5 = arith.constant 0.000000e+00 : f32
    %6 = vector.broadcast %cst_5 : f32 to vector<8x64xf32>
    %7 = arith.maximumf %5, %6 : vector<8x64xf32>
    %c0_6 = arith.constant 0 : index
    %c0_7 = arith.constant 0 : index
    %8 = vector.load %arg3[%c0_6, %c0_7] : memref<64x32xf32, #tpu.memory_space<vmem>>, vector<64x32xf32>
    %cst_8 = arith.constant dense<0.000000e+00> : vector<8x32xf32>
    %9 = tpu.matmul %7, %8, %cst_8 {dimension_numbers = #tpu.dot_dimension_numbers<[1], [0], [0], [1], [0, 0, 1, 1], [], []>} : vector<8x64xf32>, vector<64x32xf32>, vector<8x32xf32> -> vector<8x32xf32>
    %c0_9 = arith.constant 0 : index
    %c0_10 = arith.constant 0 : index
    %10 = vector.load %arg4[%c0_9, %c0_10] : memref<1x32xf32, #tpu.memory_space<vmem>>, vector<1x32xf32>
    %11 = vector.broadcast %10 : vector<1x32xf32> to vector<8x32xf32>
    %12 = arith.addf %9, %11 : vector<8x32xf32>
    %13 = arith.negf %12 : vector<8x32xf32>
    %14 = math.exp %13 : vector<8x32xf32>
    %cst_11 = arith.constant 1.000000e+00 : f32
    %15 = vector.broadcast %cst_11 : f32 to vector<8x32xf32>
    %16 = arith.addf %15, %14 : vector<8x32xf32>
    %17 = arith.divf %15, %16 : vector<8x32xf32>
    %c0_12 = arith.constant 0 : index
    %c0_13 = arith.constant 0 : index
    %18 = vector.load %arg5[%c0_12, %c0_13] : memref<8x32xf32, #tpu.memory_space<vmem>>, vector<8x32xf32>
    tpu.vector_store %arg5[%c0_12, %c0_13], %17 {strides = array<i32>} : memref<8x32xf32, #tpu.memory_space<vmem>>, vector<8x32xf32>,
    return
  }
}

</mosaic_0001>

<llo_original>
// kernel: tpu_custom_call.1
$region0: #{tpu_custom_call.1}
  #allocation0 [shape = 'u32[]', space=smem, size = 0x4, offset = 0x4, fixed_abs, tag = 'smem constant byte address 0x4 - core index']
  #allocation1 [shape = 'u32[144,128]{1,0:T(1,128)}', space=vmem, size = 0x12000, scoped, tag = 'internal scratch']
  %s0 = inlined_call_operand.vmem [shape: f32[8,32], index: 0, kind: input, shape index: {}]
  %s1 = inlined_call_operand.vmem [shape: f32[32,64], index: 1, kind: input, shape index: {}]
  %s2 = inlined_call_operand.vmem [shape: f32[1,64], index: 2, kind: input, shape index: {}]
  %s3 = inlined_call_operand.vmem [shape: f32[64,32], index: 3, kind: input, shape index: {}]
  %s4 = inlined_call_operand.vmem [shape: f32[1,32], index: 4, kind: input, shape index: {}]
  %s5 = inlined_call_operand.hbm [shape: f32[8,32], index: 5, kind: output, shape index: {}]
  %s6 = sld [smem:[#allocation0]]
  $region30: #{tpu_custom_call.1} parent=0
    _
  %s8 = ssub.s32 1, %s6
  %s9 = scalar_select 0, %s8, %s6
  $region1: #{tpu_custom_call.1} parent=0
    #allocation2 [shape = 'u8[4096]{0}', space=vmem, size = 0x1000, scoped, tag = 'output window, operand 0, single buffered']
    #allocation3 [shape = 's32[1]{0}', space=sflag, size = 0x4, scoped, tag = 'scoped memory for tpu_custom_call.1']
    %10 = vsyncpa [#allocation3], 0
    // Predicated region
    $region2: #{tpu_custom_call.1} parent=1 // pred_check
      _
    $region3: #{tpu_custom_call.1} parent=1 // pred_check_branch
      %12 = sbr.rel (0) target = $region5
    $region4: #{tpu_custom_call.1} parent=1 // pred_region
      _
    $region5: #{tpu_custom_call.1} parent=1 // pred_fallthru
      _
    // Predicated region
    $region6: #{tpu_custom_call.1} parent=1 // pred_check
      _
    $region7: #{tpu_custom_call.1} parent=1 // pred_check_branch
      %14 = sbr.rel (0) target = $region9
    $region8: #{tpu_custom_call.1} parent=1 // pred_region
      _
    $region9: #{tpu_custom_call.1} parent=1 // pred_fallthru
      _
    // Predicated region
    $region10: #{tpu_custom_call.1} parent=1 // pred_check
      _
    $region11: #{tpu_custom_call.1} parent=1 // pred_check_branch
      %16 = sbr.rel (0) target = $region13
    $region12: #{tpu_custom_call.1} parent=1 // pred_region
      _
    $region13: #{tpu_custom_call.1} parent=1 // pred_fallthru
      _
    // Predicated region
    $region14: #{tpu_custom_call.1} parent=1 // pred_check
      _
    $region15: #{tpu_custom_call.1} parent=1 // pred_check_branch
      %18 = sbr.rel (0) target = $region17
    $region16: #{tpu_custom_call.1} parent=1 // pred_region
      _
    $region17: #{tpu_custom_call.1} parent=1 // pred_fallthru
      _
    // Predicated region
    $region18: #{tpu_custom_call.1} parent=1 // pred_check
      _
    $region19: #{tpu_custom_call.1} parent=1 // pred_check_branch
      %20 = sbr.rel (0) target = $region21
    $region20: #{tpu_custom_call.1} parent=1 // pred_region
      _
    $region21: #{tpu_custom_call.1} parent=1 // pred_fallthru
      _
    %v21 = vld [vmem:[%s0] sm:$0xff]
    %v22 = vld [vmem:[%s1] sm:$0xff]
    %v23 = vld [vmem:[%s1 + $0x8] sm:$0xff]
    %v24 = vld [vmem:[%s1 + $0x10] sm:$0xff]
    %v25 = vld [vmem:[%s1 + $0x18] sm:$0xff]
    %v26 = vld [vmem:[%s2] sm:$0x1]
    %v28 = vlaneseq
    %v29 = vshrl.u32 %v28, 7
    %v30 = vsub.s32 0, %v29
    %v31 = vrot.slane %v26, %v30
    %vm33 = vcmask 261120
    %v35 = vsel %vm33, %v21, 0
    %37 = vmatprep.subr.mxu0 0.0
    %38 = vmatpush1.msra.mxu0 0.0
    %39 = vmatprep.subr.mxu0 0.0
    %40 = vmatpush1.msra.mxu0 0.0
    %41 = vmatprep.subr.mxu0 0.0
    %42 = vmatpush1.msra.mxu0 0.0
    %43 = vmatprep.subr.mxu0 0.0
    %44 = vmatpush1.msra.mxu0 0.0
    %45 = vmatprep.subr.mxu0 0.0
    %46 = vmatpush1.msra.mxu0 0.0
    %47 = vmatprep.subr.mxu0 0.0
    %48 = vmatpush1.msra.mxu0 0.0
    %49 = vmatprep.subr.mxu0 0.0
    %50 = vmatpush1.msra.mxu0 0.0
    %51 = vmatprep.subr.mxu0 0.0
    %52 = vmatpush1.msra.mxu0 0.0
    %53 = vmatprep.subr.mxu0 0.0
    %54 = vmatpush1.msra.mxu0 0.0
    %55 = vmatprep.subr.mxu0 0.0
    %56 = vmatpush1.msra.mxu0 0.0
    %57 = vmatprep.subr.mxu0 0.0
    %58 = vmatpush1.msra.mxu0 0.0
    %59 = vmatprep.subr.mxu0 0.0
    %60 = vmatpush1.msra.mxu0 0.0
    %61 = vmatprep.subr.mxu0 0.0
    %62 = vmatpush1.msra.mxu0 %v25
    %63 = vmatprep.subr.mxu0 0.0
    %64 = vmatpush1.msra.mxu0 %v24
    %65 = vmatprep.subr.mxu0 0.0
    %66 = vmatpush1.msra.mxu0 %v23
    %67 = vmatprep.subr.mxu0 0.0
    %68 = vmatpush1.msra.mxu0 %v22
    %69 = vmatprep.subr.mxu0 0.0
    %70 = vmatpush2.msra.mxu0 0.0
    %71 = vmatprep.subr.mxu0 0.0
    %72 = vmatpush2.msra.mxu0 0.0
    %73 = vmatprep.subr.mxu0 0.0
    %74 = vmatpush2.msra.mxu0 0.0
    %75 = vmatprep.subr.mxu0 0.0
    %76 = vmatpush2.msra.mxu0 0.0
    %77 = vmatprep.subr.mxu0 0.0
    %78 = vmatpush2.msra.mxu0 0.0
    %79 = vmatprep.subr.mxu0 0.0
    %80 = vmatpush2.msra.mxu0 0.0
    %81 = vmatprep.subr.mxu0 0.0
    %82 = vmatpush2.msra.mxu0 0.0
    %83 = vmatprep.subr.mxu0 0.0
    %84 = vmatpush2.msra.mxu0 0.0
    %85 = vmatprep.subr.mxu0 0.0
    %86 = vmatpush2.msra.mxu0 0.0
    %87 = vmatprep.subr.mxu0 0.0
    %88 = vmatpush2.msra.mxu0 0.0
    %89 = vmatprep.subr.mxu0 0.0
    %90 = vmatpush2.msra.mxu0 0.0
    %91 = vmatprep.subr.mxu0 0.0
    %92 = vmatpush2.msra.mxu0 0.0
    %93 = vmatprep.subr.mxu0 0.0
    %94 = vmatpush2.msra.mxu0 0.0
    %95 = vmatprep.subr.mxu0 0.0
    %96 = vmatpush2.msra.mxu0 0.0
    %97 = vmatprep.subr.mxu0 0.0
    %98 = vmatpush2.msra.mxu0 0.0
    %99 = vmatprep.subr.mxu0 0.0
    %100 = vmatpush2.msra.mxu0 0.0
    %101 = vmatprep.mubr.f32.mxu0 0.0
    %102 = vmatmul.mubr.f32.gmra.mxu0 %v35
    %v103 = vpop.f32.mrf.mxu0
    %v104 = vadd.f32 %v31, %v103
    %v105 = vpop.f32.mrf.mxu0
    %106 = vdwg.mxu0
    %v107 = vmax.f32 %v104, 0.0
    %v108 = vld [vmem:[%s3] sm:$0xff]
    %v109 = vld [vmem:[%s3 + $0x8] sm:$0xff]
    %v110 = vld [vmem:[%s3 + $0x10] sm:$0xff]
    %v111 = vld [vmem:[%s3 + $0x18] sm:$0xff]
    %v112 = vld [vmem:[%s3 + $0x20] sm:$0xff]
    %v113 = vld [vmem:[%s3 + $0x28] sm:$0xff]
    %v114 = vld [vmem:[%s3 + $0x30] sm:$0xff]
    %v115 = vld [vmem:[%s3 + $0x38] sm:$0xff]
    %v116 = vld [vmem:[%s4] sm:$0x1]
    %v118 = vlaneseq
    %v119 = vshrl.u32 %v118, 7
    %v120 = vsub.s32 0, %v119
    %v121 = vrot.slane %v116, %v120
    %vm123 = vcmask 523264
    %v125 = vsel %vm123, %v107, 0
    %127 = vmatprep.subr.mxu0 0.0
    %128 = vmatpush1.msra.mxu0 0.0
    %129 = vmatprep.subr.mxu0 0.0
    %130 = vmatpush1.msra.mxu0 0.0
    %131 = vmatprep.subr.mxu0 0.0
    %132 = vmatpush1.msra.mxu0 0.0
    %133 = vmatprep.subr.mxu0 0.0
    %134 = vmatpush1.msra.mxu0 0.0
    %135 = vmatprep.subr.mxu0 0.0
    %136 = vmatpush1.msra.mxu0 0.0
    %137 = vmatprep.subr.mxu0 0.0
    %138 = vmatpush1.msra.mxu0 0.0
    %139 = vmatprep.subr.mxu0 0.0
    %140 = vmatpush1.msra.mxu0 0.0
    %141 = vmatprep.subr.mxu0 0.0
    %142 = vmatpush1.msra.mxu0 0.0
    %143 = vmatprep.subr.mxu0 0.0
    %144 = vmatpush1.msra.mxu0 %v115
    %145 = vmatprep.subr.mxu0 0.0
    %146 = vmatpush1.msra.mxu0 %v114
    %147 = vmatprep.subr.mxu0 0.0
    %148 = vmatpush1.msra.mxu0 %v113
    %149 = vmatprep.subr.mxu0 0.0
    %150 = vmatpush1.msra.mxu0 %v112
    %151 = vmatprep.subr.mxu0 0.0
    %152 = vmatpush1.msra.mxu0 %v111
    %153 = vmatprep.subr.mxu0 0.0
    %154 = vmatpush1.msra.mxu0 %v110
    %155 = vmatprep.subr.mxu0 0.0
    %156 = vmatpush1.msra.mxu0 %v109
    %157 = vmatprep.subr.mxu0 0.0
    %158 = vmatpush1.msra.mxu0 %v108
    %159 = vmatprep.subr.mxu0 0.0
    %160 = vmatpush2.msra.mxu0 0.0
    %161 = vmatprep.subr.mxu0 0.0
    %162 = vmatpush2.msra.mxu0 0.0
    %163 = vmatprep.subr.mxu0 0.0
    %164 = vmatpush2.msra.mxu0 0.0
    %165 = vmatprep.subr.mxu0 0.0
    %166 = vmatpush2.msra.mxu0 0.0
    %167 = vmatprep.subr.mxu0 0.0
    %168 = vmatpush2.msra.mxu0 0.0
    %169 = vmatprep.subr.mxu0 0.0
    %170 = vmatpush2.msra.mxu0 0.0
    %171 = vmatprep.subr.mxu0 0.0
    %172 = vmatpush2.msra.mxu0 0.0
    %173 = vmatprep.subr.mxu0 0.0
    %174 = vmatpush2.msra.mxu0 0.0
    %175 = vmatprep.subr.mxu0 0.0
    %176 = vmatpush2.msra.mxu0 0.0
    %177 = vmatprep.subr.mxu0 0.0
    %178 = vmatpush2.msra.mxu0 0.0
    %179 = vmatprep.subr.mxu0 0.0
    %180 = vmatpush2.msra.mxu0 0.0
    %181 = vmatprep.subr.mxu0 0.0
    %182 = vmatpush2.msra.mxu0 0.0
    %183 = vmatprep.subr.mxu0 0.0
    %184 = vmatpush2.msra.mxu0 0.0
    %185 = vmatprep.subr.mxu0 0.0
    %186 = vmatpush2.msra.mxu0 0.0
    %187 = vmatprep.subr.mxu0 0.0
    %188 = vmatpush2.msra.mxu0 0.0
    %189 = vmatprep.subr.mxu0 0.0
    %190 = vmatpush2.msra.mxu0 0.0
    %191 = vmatprep.mubr.f32.mxu0 0.0
    %192 = vmatmul.mubr.f32.gmra.mxu0 %v125
    %v193 = vpop.f32.mrf.mxu0
    %v194 = vadd.f32 %v121, %v193
    %v195 = vpop.f32.mrf.mxu0
    %196 = vdwg.mxu0
    %v197 = vxor.u32 %v194, 2147483648
    %v198 = vmul.f32 %v197, 1.442695
    %v199 = vpow.pop %v198
    %v200 = vadd.f32 %v199, 1.0
    %v201 = vrcp.pop %v200
    %v202 = vmul.f32 1.0, %v201
    %203 = vst.msk [vmem:[#allocation2] sm:$0xff] %vm33, %v202
    // Predicated region
    $region22: #{tpu_custom_call.1} parent=1 // pred_check
      _
    $region23: #{tpu_custom_call.1} parent=1 // pred_check_branch
      %205 = sbr.rel (0) target = $region25
    $region24: #{tpu_custom_call.1} parent=1 // pred_region
      %s207 = ssub.s32 128, 128
      %208 = vsyncadd [#allocation3], %s207
      %s210 = sshll.u32 [#allocation2], 4
      %s211 = int_to_ptr.vmem [resolvable:$true] %s210
      %213 = dma.vmem_to_hbm [thread:$0]  %s211, 128, %s5, [#allocation3]
    $region25: #{tpu_custom_call.1} parent=1 // pred_fallthru
      _
    // Predicated region
    $region26: #{tpu_custom_call.1} parent=1 // pred_check
      _
    $region27: #{tpu_custom_call.1} parent=1 // pred_check_branch
      %215 = sbr.rel (0) target = $region29
    $region28: #{tpu_custom_call.1} parent=1 // pred_region
      %216 = dma.done [#allocation3], 128
    $region29: #{tpu_custom_call.1} parent=1 // pred_fallthru
      _
    %217 = vsyncpa [#allocation3], 1

</llo_original>
